<compile_context>
chip_gen: v6e
topology: v6e:2x2x1
jax: 0.10.0
libtpu: 0.0.40
codegen_flags: <defaults>
</compile_context>

<pallas_src>
import functools
import math

import jax
import jax.numpy as jnp
from jax.experimental import pallas as pl
from jax.experimental.pallas import tpu as pltpu


def _round_up(n, m):
    return ((n + m - 1) // m) * m


def _cdiv(a, b):
    return -(-a // b)


# ---------------------------------------------------------------------------
# Kernels
# ---------------------------------------------------------------------------
def _ln_kernel(x_ref, gamma_ref, beta_ref, o_ref, *, eps, inv_n, two_pass):
    """Standard path: each row of the block is one full normalized vector."""
    xf = x_ref[...].astype(jnp.float32)
    mean = jnp.sum(xf, axis=-1, keepdims=True) * inv_n
    if two_pass:
        xc = xf - mean
        var = jnp.sum(xc * xc, axis=-1, keepdims=True) * inv_n
    else:
        # One-pass stats: no centered full-tile temporary kept across passes.
        msq = jnp.sum(xf * xf, axis=-1, keepdims=True) * inv_n
        var = jnp.maximum(msq - mean * mean, 0.0)
    inv = jax.lax.rsqrt(var + eps)                    # EUP, off the VALU slot
    y = (xf - mean) * inv * gamma_ref[...] + beta_ref[...]
    o_ref[...] = y.astype(o_ref.dtype)


def _ln_packed_kernel(x_ref, seg_ref, gamma_ref, beta_ref, o_ref,
                      *, eps, inv_n, two_pass):
    """Lane-dense path: k rows folded per packed row (Hp = k*hidden).

    `seg` is the (Hp, Hp) 0/1 block-diagonal segment matrix:
    (x @ seg)[b, j] = sum of x over the segment lane j belongs to, already
    broadcast per lane.  This keeps stats on the (idle) MXU and keeps both
    the loads and the stores lane-dense (no masked partial stores).
    """
    xf = x_ref[...].astype(jnp.float32)
    seg = seg_ref[...]
    mean = jnp.dot(xf, seg, preferred_element_type=jnp.float32) * inv_n
    if two_pass:
        xc = xf - mean
        var = jnp.dot(xc * xc, seg, preferred_element_type=jnp.float32) * inv_n
    else:
        msq = jnp.dot(xf * xf, seg, preferred_element_type=jnp.float32) * inv_n
        var = jnp.maximum(msq - mean * mean, 0.0)
    inv = jax.lax.rsqrt(var + eps)
    y = (xf - mean) * inv * gamma_ref[...] + beta_ref[...]
    o_ref[...] = y.astype(o_ref.dtype)


# ---------------------------------------------------------------------------
# Tiling
# ---------------------------------------------------------------------------
def _vmem_capacity_bytes():
    try:
        return int(pltpu.get_tpu_info().vmem_capacity_bytes)
    except Exception:
        return 64 * 1024 * 1024   # conservative fallback: v7x has 64 MiB / TC


def _select_tiling(rows, hidden, dtype):
    """Pick block_rows + scoped-VMEM limit for a mem-bound LayerNorm."""
    itemsize = jnp.dtype(dtype).itemsize
    sublane = max(8, 32 // itemsize)         # fp32: 8, bf16: 16, int8/fp8: 32

    # Cap the *input* tile to ~4 MiB: the measured HBM roofline saturates well
    # below this; larger tiles only burn scoped VMEM (scarce on v7x) and
    # lengthen pipeline fill/drain.
    tile_cap_bytes = 4 << 20
    block_rows = tile_cap_bytes // max(hidden * itemsize, 1)
    block_rows = max(sublane, min(block_rows, 4096))
    block_rows = (block_rows // sublane) * sublane

    if block_rows >= rows:
        block_rows = rows        # one block covering the whole array (legal)
    else:
        # v7x megacore: nudge to an even number of grid steps so the 2-TC
        # "parallel" sharding stays balanced.  Harmless on 1-TC v5e/v6e
        # (at most one extra ~0.35us step).  No minimum-step rule otherwise.
        n_blocks = _cdiv(rows, block_rows)
        if n_blocks % 2 == 1:
            bal = _round_up(_cdiv(rows, n_blocks + 1), sublane)
            block_rows = max(sublane, min(bal, block_rows))

    # Scoped VMEM: double-buffered in+out tiles, fp32 widened temporaries,
    # small margin.  Never ask for more than ~70% of physical VMEM.
    # TODO(synk): for extremely large hidden (where even `sublane` rows blow
    # this budget) split hidden over a second "arbitrary" grid axis with a
    # stats pass + normalize pass instead of one huge tile.
    capacity = _vmem_capacity_bytes()
    tile_in = block_rows * hidden * itemsize
    needed = 4 * tile_in + 3 * block_rows * hidden * 4 + (4 << 20)
    vmem_limit = int(max(32 << 20, min(needed, int(capacity * 0.7))))
    return block_rows, vmem_limit


# ---------------------------------------------------------------------------
# Wrapper
# ---------------------------------------------------------------------------
def float_layer_norm(x, gamma, beta, *, eps=1e-6, one_pass_stats=True):
    """Pallas LayerNorm over the last dim.  Returns (output, scaling_factor),
    matching FloatLayerNorm.forward (scaling_factor defaults to ones(1))."""
    orig_shape = x.shape
    hidden = int(orig_shape[-1])
    rows = int(math.prod(orig_shape[:-1])) if len(orig_shape) > 1 else 1
    x2d = x.reshape(rows, hidden)

    # ---- lane-dense repack --------------------------------------------------
    # When hidden is not a multiple of 128 lanes, fold k consecutive rows into
    # one packed row of width k*hidden (a free, layout-preserving reshape) so
    # vector stores are unmasked and lane utilization is 100%.
    k = 1
    if hidden % 128 != 0:
        k_cand = 128 // math.gcd(hidden, 128)
        if rows % k_cand == 0 and k_cand * hidden <= 512:
            k = k_cand
        # TODO(synk): ragged tails (rows % k != 0) and large non-multiple-of-128
        # hidden fall back to the masked-store path below.
    packed = k > 1
    rows_e = rows // k
    hidden_e = hidden * k
    x_in = x2d.reshape(rows_e, hidden_e) if packed else x2d

    # Hoist affine params to fp32 once (no per-step casts inside the kernel).
    gamma32 = gamma.astype(jnp.float32).reshape(-1)
    beta32 = beta.astype(jnp.float32).reshape(-1)
    if packed:
        gamma2d = jnp.tile(gamma32, (k,)).reshape(1, hidden_e)
        beta2d = jnp.tile(beta32, (k,)).reshape(1, hidden_e)
        seg_ids = jnp.arange(hidden_e, dtype=jnp.int32) // hidden
        seg = (seg_ids[:, None] == seg_ids[None, :]).astype(jnp.float32)
    else:
        gamma2d = gamma32.reshape(1, hidden_e)
        beta2d = beta32.reshape(1, hidden_e)

    block_rows, vmem_limit = _select_tiling(rows_e, hidden_e, x.dtype)
    grid = (_cdiv(rows_e, block_rows),)

    x_spec = pl.BlockSpec((block_rows, hidden_e), lambda i: (i, 0))
    const_spec = pl.BlockSpec((1, hidden_e), lambda i: (0, 0))
    out_spec = pl.BlockSpec((block_rows, hidden_e), lambda i: (i, 0))

    common = dict(eps=float(eps), inv_n=1.0 / hidden, two_pass=not one_pass_stats)
    if packed:
        kernel = functools.partial(_ln_packed_kernel, **common)
        in_specs = [x_spec,
                    pl.BlockSpec((hidden_e, hidden_e), lambda i: (0, 0)),
                    const_spec, const_spec]
        args = (x_in, seg, gamma2d, beta2d)
    else:
        kernel = functools.partial(_ln_kernel, **common)
        in_specs = [x_spec, const_spec, const_spec]
        args = (x_in, gamma2d, beta2d)

    out2d = pl.pallas_call(
        kernel,
        out_shape=jax.ShapeDtypeStruct((rows_e, hidden_e), x.dtype),
        grid_spec=pltpu.PrefetchScalarGridSpec(
            num_scalar_prefetch=0,
            grid=grid,
            in_specs=in_specs,
            out_specs=out_spec,
        ),
        compiler_params=pltpu.CompilerParams(
            dimension_semantics=("parallel",),
            vmem_limit_bytes=vmem_limit,
        ),
    )(*args)

    out = out2d.reshape(orig_shape)
    # Matches FloatLayerNorm.forward: scaling_factor defaults to ones(1).
    scaling_factor = jnp.ones((1,), dtype=x.dtype)
    return out, scaling_factor


# ---------------------------------------------------------------------------
# Reference + demo
# ---------------------------------------------------------------------------
def _reference_layer_norm(x, gamma, beta, eps):
    x32 = x.astype(jnp.float32)
    mean = jnp.mean(x32, axis=-1, keepdims=True)
    var = jnp.mean((x32 - mean) ** 2, axis=-1, keepdims=True)
    y = (x32 - mean) * jax.lax.rsqrt(var + eps)
    y = y * gamma.astype(jnp.float32) + beta.astype(jnp.float32)
    return y.astype(x.dtype)


if __name__ == "__main__":
    key = jax.random.PRNGKey(0)
    kx, kg, kb, kx2 = jax.random.split(key, 4)

    # Primary example (normalized_shape = (hidden,)): hidden=32 exercises the
    # lane-dense packed path.
    batch, seq, hidden = 2, 8, 32
    x = jax.random.normal(kx, (batch, seq, hidden), dtype=jnp.float32)
    gamma = 1.0 + 0.1 * jax.random.normal(kg, (hidden,), dtype=jnp.float32)
    beta = 0.1 * jax.random.normal(kb, (hidden,), dtype=jnp.float32)

    out, scale = float_layer_norm(x, gamma, beta, eps=1e-6)
    out = jax.block_until_ready(out)
    scale = jax.block_until_ready(scale)

    ref = _reference_layer_norm(x, gamma, beta, 1e-6)
    assert out.shape == x.shape
    assert scale.shape == (1,) and float(scale[0]) == 1.0
    max_err = float(jnp.max(jnp.abs(out - ref)))
    assert jnp.allclose(out, ref, atol=1e-4, rtol=1e-4), max_err

    # Secondary example: hidden multiple of 128 -> standard (unpacked) path.
    hidden2 = 128
    x2 = jax.random.normal(kx2, (batch, seq, hidden2), dtype=jnp.float32)
    g2 = jnp.ones((hidden2,), jnp.float32)
    b2 = jnp.zeros((hidden2,), jnp.float32)
    out2, scale2 = float_layer_norm(x2, g2, b2, eps=1e-6)
    out2 = jax.block_until_ready(out2)
    ref2 = _reference_layer_norm(x2, g2, b2, 1e-6)
    assert out2.shape == x2.shape
    assert jnp.allclose(out2, ref2, atol=1e-4, rtol=1e-4)

    print("KERNEL_OK")
</pallas_src>

<mosaic_0001>
module attributes {stable_mosaic.version = 11 : i64} {
  func.func @_ln_packed_kernel(%arg0: i32, %arg1: memref<4x128xf32, #tpu.memory_space<vmem>>, %arg2: memref<128x128xf32, #tpu.memory_space<vmem>>, %arg3: memref<1x128xf32, #tpu.memory_space<vmem>>, %arg4: memref<1x128xf32, #tpu.memory_space<vmem>>, %arg5: memref<4x128xf32, #tpu.memory_space<vmem>>) attributes {dimension_semantics = [#tpu.dimension_semantics<parallel>], iteration_bounds = array<i64: 1>, scalar_prefetch = 0 : i64, scratch_operands = 0 : i64, tpu.core_type = #tpu.core_type<tc>, window_params = [{transform_indices = @transform_0, window_bounds = array<i64: 4, 128>}, {pipeline_mode = #tpu.pipeline_mode<synchronous>, transform_indices = @transform_1, window_bounds = array<i64: 128, 128>}, {pipeline_mode = #tpu.pipeline_mode<synchronous>, transform_indices = @transform_2, window_bounds = array<i64: 1, 128>}, {pipeline_mode = #tpu.pipeline_mode<synchronous>, transform_indices = @transform_3, window_bounds = array<i64: 1, 128>}, {transform_indices = @transform_4, window_bounds = array<i64: 4, 128>}]} {
    %c0 = arith.constant 0 : index
    %c0_0 = arith.constant 0 : index
    %0 = vector.load %arg1[%c0, %c0_0] : memref<4x128xf32, #tpu.memory_space<vmem>>, vector<4x128xf32>
    %c0_1 = arith.constant 0 : index
    %c0_2 = arith.constant 0 : index
    %1 = vector.load %arg2[%c0_1, %c0_2] : memref<128x128xf32, #tpu.memory_space<vmem>>, vector<128x128xf32>
    %cst = arith.constant dense<0.000000e+00> : vector<4x128xf32>
    %2 = tpu.matmul %0, %1, %cst {dimension_numbers = #tpu.dot_dimension_numbers<[1], [0], [0], [1], [0, 0, 1, 1], [], []>} : vector<4x128xf32>, vector<128x128xf32>, vector<4x128xf32> -> vector<4x128xf32>
    %cst_3 = arith.constant 3.125000e-02 : f32
    %3 = vector.broadcast %cst_3 : f32 to vector<4x128xf32>
    %4 = arith.mulf %2, %3 : vector<4x128xf32>
    %5 = arith.mulf %0, %0 : vector<4x128xf32>
    %cst_4 = arith.constant dense<0.000000e+00> : vector<4x128xf32>
    %6 = tpu.matmul %5, %1, %cst_4 {dimension_numbers = #tpu.dot_dimension_numbers<[1], [0], [0], [1], [0, 0, 1, 1], [], []>} : vector<4x128xf32>, vector<128x128xf32>, vector<4x128xf32> -> vector<4x128xf32>
    %cst_5 = arith.constant 3.125000e-02 : f32
    %7 = vector.broadcast %cst_5 : f32 to vector<4x128xf32>
    %8 = arith.mulf %6, %7 : vector<4x128xf32>
    %9 = arith.mulf %4, %4 : vector<4x128xf32>
    %10 = arith.subf %8, %9 : vector<4x128xf32>
    %cst_6 = arith.constant 0.000000e+00 : f32
    %11 = vector.broadcast %cst_6 : f32 to vector<4x128xf32>
    %12 = arith.maximumf %10, %11 : vector<4x128xf32>
    %cst_7 = arith.constant 9.99999997E-7 : f32
    %13 = vector.broadcast %cst_7 : f32 to vector<4x128xf32>
    %14 = arith.addf %12, %13 : vector<4x128xf32>
    %15 = math.rsqrt %14 : vector<4x128xf32>
    %16 = arith.subf %0, %4 : vector<4x128xf32>
    %17 = arith.mulf %16, %15 : vector<4x128xf32>
    %c0_8 = arith.constant 0 : index
    %c0_9 = arith.constant 0 : index
    %18 = vector.load %arg3[%c0_8, %c0_9] : memref<1x128xf32, #tpu.memory_space<vmem>>, vector<1x128xf32>
    %19 = vector.broadcast %18 : vector<1x128xf32> to vector<4x128xf32>
    %20 = arith.mulf %17, %19 : vector<4x128xf32>
    %c0_10 = arith.constant 0 : index
    %c0_11 = arith.constant 0 : index
    %21 = vector.load %arg4[%c0_10, %c0_11] : memref<1x128xf32, #tpu.memory_space<vmem>>, vector<1x128xf32>
    %22 = vector.broadcast %21 : vector<1x128xf32> to vector<4x128xf32>
    %23 = arith.addf %20, %22 : vector<4x128xf32>
    %c0_12 = arith.constant 0 : index
    %c0_13 = arith.constant 0 : index
    %24 = vector.load %arg5[%c0_12, %c0_13] : memref<4x128xf32, #tpu.memory_space<vmem>>, vector<4x128xf32>
    tpu.vector_store %arg5[%c0_12, %c0_13], %23 {strides = array<i32>} : memref<4x128xf32, #tpu.memory_space<vmem>>, vector<4x128xf32>,
    return
  }
  func.func @transform_0(%arg0: i32) -> (i32, i32) {
    %c0_i32 = arith.constant 0 : i32
    %c0_i32_0 = arith.constant 0 : i32
    return %arg0, %c0_i32 : i32, i32
  }
  func.func @transform_1(%arg0: i32) -> (i32, i32) {
    %c0_i32 = arith.constant 0 : i32
    %c0_i32_0 = arith.constant 0 : i32
    %c0_i32_1 = arith.constant 0 : i32
    return %c0_i32, %c0_i32_0 : i32, i32
  }
  func.func @transform_2(%arg0: i32) -> (i32, i32) {
    %c0_i32 = arith.constant 0 : i32
    %c0_i32_0 = arith.constant 0 : i32
    %c0_i32_1 = arith.constant 0 : i32
    return %c0_i32, %c0_i32_0 : i32, i32
  }
  func.func @transform_3(%arg0: i32) -> (i32, i32) {
    %c0_i32 = arith.constant 0 : i32
    %c0_i32_0 = arith.constant 0 : i32
    %c0_i32_1 = arith.constant 0 : i32
    return %c0_i32, %c0_i32_0 : i32, i32
  }
  func.func @transform_4(%arg0: i32) -> (i32, i32) {
    %c0_i32 = arith.constant 0 : i32
    %c0_i32_0 = arith.constant 0 : i32
    return %arg0, %c0_i32 : i32, i32
  }
}

</mosaic_0001>

<llo_original>
// kernel: tpu_custom_call.1
$region0: #{tpu_custom_call.1}
  #allocation0 [shape = 'u32[]', space=smem, size = 0x4, offset = 0x4, fixed_abs, tag = 'smem constant byte address 0x4 - core index']
  #allocation1 [shape = 'u32[144,128]{1,0:T(1,128)}', space=vmem, size = 0x12000, scoped, tag = 'internal scratch']
  %s0 = inlined_call_operand.hbm [shape: f32[4,128], index: 0, kind: input, shape index: {}]
  %s1 = inlined_call_operand.hbm [shape: f32[128,128], index: 1, kind: input, shape index: {}]
  %s2 = inlined_call_operand.vmem [shape: f32[1,128], index: 2, kind: input, shape index: {}]
  %s3 = inlined_call_operand.vmem [shape: f32[1,128], index: 3, kind: input, shape index: {}]
  %s4 = inlined_call_operand.hbm [shape: f32[4,128], index: 4, kind: output, shape index: {}]
  %s5 = sld [smem:[#allocation0]]
  $region34: #{tpu_custom_call.1} parent=0
    _
  %s7 = ssub.s32 1, %s5
  %s8 = scalar_select 0, %s7, %s5
  $region1: #{tpu_custom_call.1} parent=0
    #allocation2 [shape = 'u8[2048]{0}', space=vmem, size = 0x800, scoped, tag = 'input window, operand 0, single buffered']
    #allocation3 [shape = 's32[1]{0}', space=sflag, size = 0x4, scoped, tag = 'scoped memory for tpu_custom_call.1']
    #allocation4 [shape = 's32[1]{0}', space=sflag, size = 0x4, scoped, tag = 'scoped memory for tpu_custom_call.1']
    #allocation5 [shape = 'u8[65536]{0}', space=vmem, size = 0x10000, scoped, tag = 'input window, operand 1, single buffered']
    #allocation6 [shape = 's32[1]{0}', space=sflag, size = 0x4, scoped, tag = 'scoped memory for tpu_custom_call.1']
    #allocation7 [shape = 'u8[2048]{0}', space=vmem, size = 0x800, scoped, tag = 'output window, operand 0, single buffered']
    %9 = vsyncpa [#allocation3], 0
    %10 = vsyncpa [#allocation6], 0
    %11 = vsyncpa [#allocation4], 0
    // Predicated region
    $region2: #{tpu_custom_call.1} parent=1 // pred_check
      _
    $region3: #{tpu_custom_call.1} parent=1 // pred_check_branch
      %13 = sbr.rel (0) target = $region5
    $region4: #{tpu_custom_call.1} parent=1 // pred_region
      %s15 = ssub.s32 64, 64
      %16 = vsyncadd [#allocation3], %s15
      %s18 = sshll.u32 [#allocation2], 4
      %s19 = int_to_ptr.vmem [resolvable:$true] %s18
      %21 = dma.hbm_to_vmem [thread:$0]  %s0, 64, %s19, [#allocation3]
    $region5: #{tpu_custom_call.1} parent=1 // pred_fallthru
      _
    // Predicated region
    $region6: #{tpu_custom_call.1} parent=1 // pred_check
      _
    $region7: #{tpu_custom_call.1} parent=1 // pred_check_branch
      %23 = sbr.rel (0) target = $region9
    $region8: #{tpu_custom_call.1} parent=1 // pred_region
      %s25 = ssub.s32 2048, 2048
      %26 = vsyncadd [#allocation6], %s25
      %s27 = sshll.u32 [#allocation5], 4
      %s28 = int_to_ptr.vmem [resolvable:$true] %s27
      %33 = dma.hbm_to_vmem [thread:$0]  %s1, 2048, %s28, [#allocation6], 128, 128, 8
    $region9: #{tpu_custom_call.1} parent=1 // pred_fallthru
      _
    // Predicated region
    $region10: #{tpu_custom_call.1} parent=1 // pred_check
      _
    $region11: #{tpu_custom_call.1} parent=1 // pred_check_branch
      %35 = sbr.rel (0) target = $region13
    $region12: #{tpu_custom_call.1} parent=1 // pred_region
      _
    $region13: #{tpu_custom_call.1} parent=1 // pred_fallthru
      _
    // Predicated region
    $region14: #{tpu_custom_call.1} parent=1 // pred_check
      _
    $region15: #{tpu_custom_call.1} parent=1 // pred_check_branch
      %37 = sbr.rel (0) target = $region17
    $region16: #{tpu_custom_call.1} parent=1 // pred_region
      _
    $region17: #{tpu_custom_call.1} parent=1 // pred_fallthru
      _
    // Predicated region
    $region18: #{tpu_custom_call.1} parent=1 // pred_check
      _
    $region19: #{tpu_custom_call.1} parent=1 // pred_check_branch
      %39 = sbr.rel (0) target = $region21
    $region20: #{tpu_custom_call.1} parent=1 // pred_region
      %40 = dma.done [#allocation3], 64
    $region21: #{tpu_custom_call.1} parent=1 // pred_fallthru
      _
    // Predicated region
    $region22: #{tpu_custom_call.1} parent=1 // pred_check
      _
    $region23: #{tpu_custom_call.1} parent=1 // pred_check_branch
      %42 = sbr.rel (0) target = $region25
    $region24: #{tpu_custom_call.1} parent=1 // pred_region
      %43 = dma.done [#allocation6], 2048
    $region25: #{tpu_custom_call.1} parent=1 // pred_fallthru
      _
    %v44 = vld [vmem:[#allocation2] sm:$0xf]
    %v45 = vld [vmem:[#allocation5] sm:$0xff]
    %v46 = vld [vmem:[#allocation5 + $0x8] sm:$0xff]
    %v47 = vld [vmem:[#allocation5 + $0x10] sm:$0xff]
    %v48 = vld [vmem:[#allocation5 + $0x18] sm:$0xff]
    %v49 = vld [vmem:[#allocation5 + $0x20] sm:$0xff]
    %v50 = vld [vmem:[#allocation5 + $0x28] sm:$0xff]
    %v51 = vld [vmem:[#allocation5 + $0x30] sm:$0xff]
    %v52 = vld [vmem:[#allocation5 + $0x38] sm:$0xff]
    %v53 = vld [vmem:[#allocation5 + $0x40] sm:$0xff]
    %v54 = vld [vmem:[#allocation5 + $0x48] sm:$0xff]
    %v55 = vld [vmem:[#allocation5 + $0x50] sm:$0xff]
    %v56 = vld [vmem:[#allocation5 + $0x58] sm:$0xff]
    %v57 = vld [vmem:[#allocation5 + $0x60] sm:$0xff]
    %v58 = vld [vmem:[#allocation5 + $0x68] sm:$0xff]
    %v59 = vld [vmem:[#allocation5 + $0x70] sm:$0xff]
    %v60 = vld [vmem:[#allocation5 + $0x78] sm:$0xff]
    %61 = vmatprep.subr.mxu0 0.0
    %62 = vmatpush1.msra.mxu0 %v60
    %63 = vmatprep.subr.mxu0 0.0
    %64 = vmatpush1.msra.mxu0 %v59
    %65 = vmatprep.subr.mxu0 0.0
    %66 = vmatpush1.msra.mxu0 %v58
    %67 = vmatprep.subr.mxu0 0.0
    %68 = vmatpush1.msra.mxu0 %v57
    %69 = vmatprep.subr.mxu0 0.0
    %70 = vmatpush1.msra.mxu0 %v56
    %71 = vmatprep.subr.mxu0 0.0
    %72 = vmatpush1.msra.mxu0 %v55
    %73 = vmatprep.subr.mxu0 0.0
    %74 = vmatpush1.msra.mxu0 %v54
    %75 = vmatprep.subr.mxu0 0.0
    %76 = vmatpush1.msra.mxu0 %v53
    %77 = vmatprep.subr.mxu0 0.0
    %78 = vmatpush1.msra.mxu0 %v52
    %79 = vmatprep.subr.mxu0 0.0
    %80 = vmatpush1.msra.mxu0 %v51
    %81 = vmatprep.subr.mxu0 0.0
    %82 = vmatpush1.msra.mxu0 %v50
    %83 = vmatprep.subr.mxu0 0.0
    %84 = vmatpush1.msra.mxu0 %v49
    %85 = vmatprep.subr.mxu0 0.0
    %86 = vmatpush1.msra.mxu0 %v48
    %87 = vmatprep.subr.mxu0 0.0
    %88 = vmatpush1.msra.mxu0 %v47
    %89 = vmatprep.subr.mxu0 0.0
    %90 = vmatpush1.msra.mxu0 %v46
    %91 = vmatprep.subr.mxu0 0.0
    %92 = vmatpush1.msra.mxu0 %v45
    %93 = vmatprep.subr.mxu0 0.0
    %94 = vmatpush2.msra.mxu0 0.0
    %95 = vmatprep.subr.mxu0 0.0
    %96 = vmatpush2.msra.mxu0 0.0
    %97 = vmatprep.subr.mxu0 0.0
    %98 = vmatpush2.msra.mxu0 0.0
    %99 = vmatprep.subr.mxu0 0.0
    %100 = vmatpush2.msra.mxu0 0.0
    %101 = vmatprep.subr.mxu0 0.0
    %102 = vmatpush2.msra.mxu0 0.0
    %103 = vmatprep.subr.mxu0 0.0
    %104 = vmatpush2.msra.mxu0 0.0
    %105 = vmatprep.subr.mxu0 0.0
    %106 = vmatpush2.msra.mxu0 0.0
    %107 = vmatprep.subr.mxu0 0.0
    %108 = vmatpush2.msra.mxu0 0.0
    %109 = vmatprep.subr.mxu0 0.0
    %110 = vmatpush2.msra.mxu0 0.0
    %111 = vmatprep.subr.mxu0 0.0
    %112 = vmatpush2.msra.mxu0 0.0
    %113 = vmatprep.subr.mxu0 0.0
    %114 = vmatpush2.msra.mxu0 0.0
    %115 = vmatprep.subr.mxu0 0.0
    %116 = vmatpush2.msra.mxu0 0.0
    %117 = vmatprep.subr.mxu0 0.0
    %118 = vmatpush2.msra.mxu0 0.0
    %119 = vmatprep.subr.mxu0 0.0
    %120 = vmatpush2.msra.mxu0 0.0
    %121 = vmatprep.subr.mxu0 0.0
    %122 = vmatpush2.msra.mxu0 0.0
    %123 = vmatprep.subr.mxu0 0.0
    %124 = vmatpush2.msra.mxu0 0.0
    %125 = vmatprep.mubr.f32.mxu0 0.0
    %126 = vmatmul.mubr.f32.gmra.mxu0 %v44
    %v127 = vpop.f32.mrf.mxu0
    %v128 = vadd.f32 0.0, %v127
    %v129 = vpop.f32.mrf.mxu0
    %130 = vdwg.mxu0
    %v131 = vmul.f32 %v128, 0.03125
    %v132 = vmul.f32 %v44, %v44
    %133 = vmatprep.subr.mxu0 0.0
    %134 = vmatpush1.msra.mxu0 %v60
    %135 = vmatprep.subr.mxu0 0.0
    %136 = vmatpush1.msra.mxu0 %v59
    %137 = vmatprep.subr.mxu0 0.0
    %138 = vmatpush1.msra.mxu0 %v58
    %139 = vmatprep.subr.mxu0 0.0
    %140 = vmatpush1.msra.mxu0 %v57
    %141 = vmatprep.subr.mxu0 0.0
    %142 = vmatpush1.msra.mxu0 %v56
    %143 = vmatprep.subr.mxu0 0.0
    %144 = vmatpush1.msra.mxu0 %v55
    %145 = vmatprep.subr.mxu0 0.0
    %146 = vmatpush1.msra.mxu0 %v54
    %147 = vmatprep.subr.mxu0 0.0
    %148 = vmatpush1.msra.mxu0 %v53
    %149 = vmatprep.subr.mxu0 0.0
    %150 = vmatpush1.msra.mxu0 %v52
    %151 = vmatprep.subr.mxu0 0.0
    %152 = vmatpush1.msra.mxu0 %v51
    %153 = vmatprep.subr.mxu0 0.0
    %154 = vmatpush1.msra.mxu0 %v50
    %155 = vmatprep.subr.mxu0 0.0
    %156 = vmatpush1.msra.mxu0 %v49
    %157 = vmatprep.subr.mxu0 0.0
    %158 = vmatpush1.msra.mxu0 %v48
    %159 = vmatprep.subr.mxu0 0.0
    %160 = vmatpush1.msra.mxu0 %v47
    %161 = vmatprep.subr.mxu0 0.0
    %162 = vmatpush1.msra.mxu0 %v46
    %163 = vmatprep.subr.mxu0 0.0
    %164 = vmatpush1.msra.mxu0 %v45
    %165 = vmatprep.subr.mxu0 0.0
    %166 = vmatpush2.msra.mxu0 0.0
    %167 = vmatprep.subr.mxu0 0.0
    %168 = vmatpush2.msra.mxu0 0.0
    %169 = vmatprep.subr.mxu0 0.0
    %170 = vmatpush2.msra.mxu0 0.0
    %171 = vmatprep.subr.mxu0 0.0
    %172 = vmatpush2.msra.mxu0 0.0
    %173 = vmatprep.subr.mxu0 0.0
    %174 = vmatpush2.msra.mxu0 0.0
    %175 = vmatprep.subr.mxu0 0.0
    %176 = vmatpush2.msra.mxu0 0.0
    %177 = vmatprep.subr.mxu0 0.0
    %178 = vmatpush2.msra.mxu0 0.0
    %179 = vmatprep.subr.mxu0 0.0
    %180 = vmatpush2.msra.mxu0 0.0
    %181 = vmatprep.subr.mxu0 0.0
    %182 = vmatpush2.msra.mxu0 0.0
    %183 = vmatprep.subr.mxu0 0.0
    %184 = vmatpush2.msra.mxu0 0.0
    %185 = vmatprep.subr.mxu0 0.0
    %186 = vmatpush2.msra.mxu0 0.0
    %187 = vmatprep.subr.mxu0 0.0
    %188 = vmatpush2.msra.mxu0 0.0
    %189 = vmatprep.subr.mxu0 0.0
    %190 = vmatpush2.msra.mxu0 0.0
    %191 = vmatprep.subr.mxu0 0.0
    %192 = vmatpush2.msra.mxu0 0.0
    %193 = vmatprep.subr.mxu0 0.0
    %194 = vmatpush2.msra.mxu0 0.0
    %195 = vmatprep.subr.mxu0 0.0
    %196 = vmatpush2.msra.mxu0 0.0
    %197 = vmatprep.mubr.f32.mxu0 0.0
    %198 = vmatmul.mubr.f32.gmra.mxu0 %v132
    %v199 = vpop.f32.mrf.mxu0
    %v200 = vadd.f32 0.0, %v199
    %v201 = vpop.f32.mrf.mxu0
    %202 = vdwg.mxu0
    %v203 = vmul.f32 %v200, 0.03125
    %v204 = vmul.f32 %v131, %v131
    %v205 = vsub.f32 %v203, %v204
    %v206 = vmax.f32 %v205, 0.0
    %v207 = vadd.f32 %v206, 1e-06
    %v208 = vrsqrt.pop %v207
    %v209 = vsub.f32 %v44, %v131
    %v210 = vmul.f32 %v209, %v208
    %v211 = vld [vmem:[%s2] sm:$0x1]
    %v213 = vlaneseq
    %v214 = vshrl.u32 %v213, 7
    %v215 = vsub.s32 0, %v214
    %v216 = vrot.slane %v211, %v215
    %v218 = vmul.f32 %v210, %v216
    %v219 = vld [vmem:[%s3] sm:$0x1]
    %v221 = vlaneseq
    %v222 = vshrl.u32 %v221, 7
    %v223 = vsub.s32 0, %v222
    %v224 = vrot.slane %v219, %v223
    %v226 = vadd.f32 %v218, %v224
    %227 = vst [vmem:[#allocation7] sm:$0xf] %v226
    // Predicated region
    $region26: #{tpu_custom_call.1} parent=1 // pred_check
      _
    $region27: #{tpu_custom_call.1} parent=1 // pred_check_branch
      %229 = sbr.rel (0) target = $region29
    $region28: #{tpu_custom_call.1} parent=1 // pred_region
      %s231 = ssub.s32 64, 64
      %232 = vsyncadd [#allocation4], %s231
      %s234 = sshll.u32 [#allocation7], 4
      %s235 = int_to_ptr.vmem [resolvable:$true] %s234
      %237 = dma.vmem_to_hbm [thread:$0]  %s235, 64, %s4, [#allocation4]
    $region29: #{tpu_custom_call.1} parent=1 // pred_fallthru
      _
    // Predicated region
    $region30: #{tpu_custom_call.1} parent=1 // pred_check
      _
    $region31: #{tpu_custom_call.1} parent=1 // pred_check_branch
      %239 = sbr.rel (0) target = $region33
    $region32: #{tpu_custom_call.1} parent=1 // pred_region
      %240 = dma.done [#allocation4], 64
    $region33: #{tpu_custom_call.1} parent=1 // pred_fallthru
      _
    %241 = vsyncpa [#allocation3], 1
    %242 = vsyncpa [#allocation6], 1
    %243 = vsyncpa [#allocation4], 1

</llo_original>
